<compile_context>
chip_gen: v7x
topology: tpu7x:2x2x1
jax: 0.10.0
libtpu: 0.0.40
codegen_flags: <defaults>
</compile_context>

<pallas_src>
import jax
import jax.numpy as jnp
from jax import lax
from jax.experimental import pallas as pl
from jax.experimental.pallas import tpu as pltpu


def _sparsemax_kernel(x_ref, o_ref):
    """x_ref / o_ref: (N, B) — sparsemax axis on sublanes, independent rows on lanes."""
    z = x_ref[...].astype(jnp.float32)
    N, B = z.shape

    # match reference: subtract max along the sparsemax axis for stability
    z = z - jnp.max(z, axis=0, keepdims=True)

    # For each element i, accumulate over all other elements j:
    #   rank_count[i] = #{ j : z_j > z_i  or (z_j == z_i and j < i) }
    #   sum_before[i] = sum of those z_j
    # This reproduces a stable descending sort's rank/cumsum exactly, with an
    # O(N) loop and only a few (N, B) live arrays (no (N, N, B) intermediates).
    i_idx = lax.broadcasted_iota(jnp.int32, (N, B), 0)
    rank_count = jnp.zeros((N, B), jnp.float32)
    sum_before = jnp.zeros((N, B), jnp.float32)

    if N <= 128:
        # Small static N: fully unrolled, j is a compile-time constant.
        for j in range(N):
            zj = z[j:j + 1, :]                                        # (1, B)
            before = ((zj > z) | ((zj == z) & (i_idx > j))).astype(jnp.float32)
            rank_count = rank_count + before
            sum_before = sum_before + before * zj
    else:
        # Large N: rolled loop to bound unrolled code size.
        def body(j, carry):
            rc, sb = carry
            zj = lax.dynamic_slice_in_dim(z, j, 1, axis=0)            # (1, B)
            before = ((zj > z) | ((zj == z) & (i_idx > j))).astype(jnp.float32)
            return rc + before, sb + before * zj

        rank_count, sum_before = lax.fori_loop(0, N, body, (rank_count, sum_before))

    rank = rank_count + 1.0            # 1-based rank in the stable descending sort
    cumsum_at_rank = sum_before + z    # cumsum of sorted values evaluated at that rank

    # support test:  1 + rank * z_sorted > cumsum(z_sorted)
    is_gt = (1.0 + rank * z > cumsum_at_rank).astype(jnp.float32)     # (N, B)

    k = jnp.max(is_gt * rank, axis=0, keepdims=True)                  # (1, B), k >= 1
    zs_sum = jnp.sum(is_gt * z, axis=0, keepdims=True)                # (1, B)
    taus = (zs_sum - 1.0) / k

    o_ref[...] = jnp.maximum(0.0, z - taus).astype(o_ref.dtype)


def _choose_block_cols(R: int, target: int = 1024):
    """Pick a lane-aligned block width; prefer no padding and blocks <= target."""
    if R <= 256:
        return R, R                          # single full-width block, no pad / slice
    best = 0
    for bc in range(128, min(target, R) + 1, 128):
        if R % bc == 0:
            best = bc
    if best:
        return best, R                       # exact tiling, no padding needed
    # fall back: pad up to a multiple of 128 and tile that
    Rp = ((R + 127) // 128) * 128
    best = 128
    for bc in range(128, min(target, Rp) + 1, 128):
        if Rp % bc == 0:
            best = bc
    return best, Rp


def _sparsemax_lanes(x2d: jax.Array, target_block_cols: int = 1024) -> jax.Array:
    """Sparsemax along axis 0 of a (N, R) slab (columns are independent rows)."""
    N, R = x2d.shape
    bc, Rp = _choose_block_cols(R, target_block_cols)
    xp = x2d if Rp == R else jnp.pad(x2d, ((0, 0), (0, Rp - R)))

    out = pl.pallas_call(
        _sparsemax_kernel,
        out_shape=jax.ShapeDtypeStruct((N, Rp), x2d.dtype),
        grid_spec=pltpu.PrefetchScalarGridSpec(
            num_scalar_prefetch=0,
            grid=(Rp // bc,),
            in_specs=[pl.BlockSpec((N, bc), lambda i: (0, i))],
            out_specs=pl.BlockSpec((N, bc), lambda i: (0, i)),
        ),
        compiler_params=pltpu.CompilerParams(
            dimension_semantics=("parallel",),
            vmem_limit_bytes=32 * 1024 * 1024,
        ),
    )(xp)
    return out if Rp == R else out[:, :R]


def sparsemax(x: jax.Array, dim: int = -1) -> jax.Array:
    """JAX/Pallas equivalent of SparsemaxFunction.forward / Sparsemax(dim)(x)."""
    input_dim = x.ndim
    if input_dim <= dim or dim < -input_dim:
        raise IndexError(
            f"Dimension out of range (expected to be in range of "
            f"[-{input_dim}, {input_dim - 1}], but got {dim})"
        )
    if dim < 0:
        dim = input_dim + dim

    # Move the reduction axis first and flatten the rest -> lane-dense (N, R).
    xm = jnp.moveaxis(x, dim, 0)
    N = xm.shape[0]
    lead_shape = xm.shape[1:]
    x2d = xm.reshape(N, -1)

    out2d = _sparsemax_lanes(x2d)

    out = out2d.reshape((N,) + lead_shape)
    return jnp.moveaxis(out, 0, dim)


class Sparsemax:
    """Mirror of the PyTorch nn.Module API (no parameters)."""

    def __init__(self, dim: int = -1):
        self.dim = dim

    def __call__(self, x: jax.Array) -> jax.Array:
        return sparsemax(x, dim=self.dim)


def _sparsemax_ref(x: jax.Array, dim: int = -1) -> jax.Array:
    """Pure-JAX reference (sort-based) mirroring the PyTorch forward."""
    xm = jnp.moveaxis(x, dim, -1)
    z = xm - jnp.max(xm, axis=-1, keepdims=True)
    zs = jnp.flip(jnp.sort(z, axis=-1), axis=-1)
    rng = jnp.arange(1, z.shape[-1] + 1, dtype=z.dtype)
    bound = 1.0 + rng * zs
    is_gt = (bound > jnp.cumsum(zs, axis=-1)).astype(z.dtype)
    k = jnp.max(is_gt * rng, axis=-1, keepdims=True)
    taus = (jnp.sum(is_gt * zs, axis=-1, keepdims=True) - 1.0) / k
    out = jnp.maximum(jnp.zeros_like(z), z - taus)
    return jnp.moveaxis(out, -1, dim)


if __name__ == "__main__":
    key = jax.random.PRNGKey(0)
    k1, k2 = jax.random.split(key)

    # NCHW-style input, sparsemax over the last (W) axis (module default dim=-1).
    x = jax.random.normal(k1, (2, 4, 16, 16), dtype=jnp.float32) * 3.0
    module = Sparsemax(dim=-1)
    y = jax.block_until_ready(module(x))

    y_ref = _sparsemax_ref(x, dim=-1)
    assert y.shape == x.shape and y.dtype == x.dtype
    assert jnp.allclose(y, y_ref, atol=1e-5, rtol=1e-5)
    # sparsemax outputs are a valid probability distribution over the axis
    assert jnp.allclose(jnp.sum(y, axis=-1), 1.0, atol=1e-5)
    assert bool(jnp.all(y >= 0.0))

    # Second case: reduction over a middle axis exercises the layout plumbing.
    x2 = jax.random.normal(k2, (4, 8, 32), dtype=jnp.float32)
    y2 = jax.block_until_ready(Sparsemax(dim=1)(x2))
    y2_ref = _sparsemax_ref(x2, dim=1)
    assert y2.shape == x2.shape
    assert jnp.allclose(y2, y2_ref, atol=1e-5, rtol=1e-5)
    assert jnp.allclose(jnp.sum(y2, axis=1), 1.0, atol=1e-5)

    print("KERNEL_OK")
</pallas_src>

<mosaic_0001>
module attributes {stable_mosaic.version = 11 : i64} {
  func.func @_sparsemax_kernel(%arg0: i32, %arg1: memref<16x128xf32, #tpu.memory_space<vmem>>, %arg2: memref<16x128xf32, #tpu.memory_space<vmem>>) attributes {dimension_semantics = [#tpu.dimension_semantics<parallel>], iteration_bounds = array<i64: 1>, scalar_prefetch = 0 : i64, scratch_operands = 0 : i64, tpu.core_type = #tpu.core_type<tc>, window_params = [{transform_indices = @transform_0, window_bounds = array<i64: 16, 128>}, {transform_indices = @transform_1, window_bounds = array<i64: 16, 128>}]} {
    %c0 = arith.constant 0 : index
    %c0_0 = arith.constant 0 : index
    %0 = vector.load %arg1[%c0, %c0_0] : memref<16x128xf32, #tpu.memory_space<vmem>>, vector<16x128xf32>
    %cst = arith.constant dense<0xFF800000> : vector<128xf32>
    %1 = vector.multi_reduction <maximumf>, %0, %cst [0] : vector<16x128xf32> to vector<128xf32>
    %2 = vector.shape_cast %1 : vector<128xf32> to vector<1x128xf32>
    %3 = vector.broadcast %2 : vector<1x128xf32> to vector<16x128xf32>
    %4 = arith.subf %0, %3 : vector<16x128xf32>
    %5 = tpu.iota {dimensions = array<i32: 0>} : vector<16x128xi32>
    %cst_1 = arith.constant 0.000000e+00 : f32
    %6 = vector.broadcast %cst_1 : f32 to vector<16x128xf32>
    %cst_2 = arith.constant 0.000000e+00 : f32
    %7 = vector.broadcast %cst_2 : f32 to vector<16x128xf32>
    %8 = vector.extract_strided_slice %4 {offsets = [0, 0], sizes = [1, 128], strides = [1, 1]} : vector<16x128xf32> to vector<1x128xf32>
    %9 = vector.broadcast %8 : vector<1x128xf32> to vector<16x128xf32>
    %10 = arith.cmpf ogt, %9, %4 : vector<16x128xf32>
    %11 = vector.broadcast %8 : vector<1x128xf32> to vector<16x128xf32>
    %12 = arith.cmpf oeq, %11, %4 : vector<16x128xf32>
    %c0_i32 = arith.constant 0 : i32
    %13 = vector.broadcast %c0_i32 : i32 to vector<16x128xi32>
    %14 = arith.cmpi sgt, %5, %13 : vector<16x128xi32>
    %15 = arith.andi %12, %14 : vector<16x128xi1>
    %16 = arith.ori %10, %15 : vector<16x128xi1>
    %17 = arith.extui %16 : vector<16x128xi1> to vector<16x128xi32>
    %18 = arith.sitofp %17 : vector<16x128xi32> to vector<16x128xf32>
    %19 = arith.addf %6, %18 : vector<16x128xf32>
    %20 = vector.broadcast %8 : vector<1x128xf32> to vector<16x128xf32>
    %21 = arith.mulf %18, %20 : vector<16x128xf32>
    %22 = arith.addf %7, %21 : vector<16x128xf32>
    %23 = vector.extract_strided_slice %4 {offsets = [1, 0], sizes = [1, 128], strides = [1, 1]} : vector<16x128xf32> to vector<1x128xf32>
    %24 = vector.broadcast %23 : vector<1x128xf32> to vector<16x128xf32>
    %25 = arith.cmpf ogt, %24, %4 : vector<16x128xf32>
    %26 = vector.broadcast %23 : vector<1x128xf32> to vector<16x128xf32>
    %27 = arith.cmpf oeq, %26, %4 : vector<16x128xf32>
    %c1_i32 = arith.constant 1 : i32
    %28 = vector.broadcast %c1_i32 : i32 to vector<16x128xi32>
    %29 = arith.cmpi sgt, %5, %28 : vector<16x128xi32>
    %30 = arith.andi %27, %29 : vector<16x128xi1>
    %31 = arith.ori %25, %30 : vector<16x128xi1>
    %32 = arith.extui %31 : vector<16x128xi1> to vector<16x128xi32>
    %33 = arith.sitofp %32 : vector<16x128xi32> to vector<16x128xf32>
    %34 = arith.addf %19, %33 : vector<16x128xf32>
    %35 = vector.broadcast %23 : vector<1x128xf32> to vector<16x128xf32>
    %36 = arith.mulf %33, %35 : vector<16x128xf32>
    %37 = arith.addf %22, %36 : vector<16x128xf32>
    %38 = vector.extract_strided_slice %4 {offsets = [2, 0], sizes = [1, 128], strides = [1, 1]} : vector<16x128xf32> to vector<1x128xf32>
    %39 = vector.broadcast %38 : vector<1x128xf32> to vector<16x128xf32>
    %40 = arith.cmpf ogt, %39, %4 : vector<16x128xf32>
    %41 = vector.broadcast %38 : vector<1x128xf32> to vector<16x128xf32>
    %42 = arith.cmpf oeq, %41, %4 : vector<16x128xf32>
    %c2_i32 = arith.constant 2 : i32
    %43 = vector.broadcast %c2_i32 : i32 to vector<16x128xi32>
    %44 = arith.cmpi sgt, %5, %43 : vector<16x128xi32>
    %45 = arith.andi %42, %44 : vector<16x128xi1>
    %46 = arith.ori %40, %45 : vector<16x128xi1>
    %47 = arith.extui %46 : vector<16x128xi1> to vector<16x128xi32>
    %48 = arith.sitofp %47 : vector<16x128xi32> to vector<16x128xf32>
    %49 = arith.addf %34, %48 : vector<16x128xf32>
    %50 = vector.broadcast %38 : vector<1x128xf32> to vector<16x128xf32>
    %51 = arith.mulf %48, %50 : vector<16x128xf32>
    %52 = arith.addf %37, %51 : vector<16x128xf32>
    %53 = vector.extract_strided_slice %4 {offsets = [3, 0], sizes = [1, 128], strides = [1, 1]} : vector<16x128xf32> to vector<1x128xf32>
    %54 = vector.broadcast %53 : vector<1x128xf32> to vector<16x128xf32>
    %55 = arith.cmpf ogt, %54, %4 : vector<16x128xf32>
    %56 = vector.broadcast %53 : vector<1x128xf32> to vector<16x128xf32>
    %57 = arith.cmpf oeq, %56, %4 : vector<16x128xf32>
    %c3_i32 = arith.constant 3 : i32
    %58 = vector.broadcast %c3_i32 : i32 to vector<16x128xi32>
    %59 = arith.cmpi sgt, %5, %58 : vector<16x128xi32>
    %60 = arith.andi %57, %59 : vector<16x128xi1>
    %61 = arith.ori %55, %60 : vector<16x128xi1>
    %62 = arith.extui %61 : vector<16x128xi1> to vector<16x128xi32>
    %63 = arith.sitofp %62 : vector<16x128xi32> to vector<16x128xf32>
    %64 = arith.addf %49, %63 : vector<16x128xf32>
    %65 = vector.broadcast %53 : vector<1x128xf32> to vector<16x128xf32>
    %66 = arith.mulf %63, %65 : vector<16x128xf32>
    %67 = arith.addf %52, %66 : vector<16x128xf32>
    %68 = vector.extract_strided_slice %4 {offsets = [4, 0], sizes = [1, 128], strides = [1, 1]} : vector<16x128xf32> to vector<1x128xf32>
    %69 = vector.broadcast %68 : vector<1x128xf32> to vector<16x128xf32>
    %70 = arith.cmpf ogt, %69, %4 : vector<16x128xf32>
    %71 = vector.broadcast %68 : vector<1x128xf32> to vector<16x128xf32>
    %72 = arith.cmpf oeq, %71, %4 : vector<16x128xf32>
    %c4_i32 = arith.constant 4 : i32
    %73 = vector.broadcast %c4_i32 : i32 to vector<16x128xi32>
    %74 = arith.cmpi sgt, %5, %73 : vector<16x128xi32>
    %75 = arith.andi %72, %74 : vector<16x128xi1>
    %76 = arith.ori %70, %75 : vector<16x128xi1>
    %77 = arith.extui %76 : vector<16x128xi1> to vector<16x128xi32>
    %78 = arith.sitofp %77 : vector<16x128xi32> to vector<16x128xf32>
    %79 = arith.addf %64, %78 : vector<16x128xf32>
    %80 = vector.broadcast %68 : vector<1x128xf32> to vector<16x128xf32>
    %81 = arith.mulf %78, %80 : vector<16x128xf32>
    %82 = arith.addf %67, %81 : vector<16x128xf32>
    %83 = vector.extract_strided_slice %4 {offsets = [5, 0], sizes = [1, 128], strides = [1, 1]} : vector<16x128xf32> to vector<1x128xf32>
    %84 = vector.broadcast %83 : vector<1x128xf32> to vector<16x128xf32>
    %85 = arith.cmpf ogt, %84, %4 : vector<16x128xf32>
    %86 = vector.broadcast %83 : vector<1x128xf32> to vector<16x128xf32>
    %87 = arith.cmpf oeq, %86, %4 : vector<16x128xf32>
    %c5_i32 = arith.constant 5 : i32
    %88 = vector.broadcast %c5_i32 : i32 to vector<16x128xi32>
    %89 = arith.cmpi sgt, %5, %88 : vector<16x128xi32>
    %90 = arith.andi %87, %89 : vector<16x128xi1>
    %91 = arith.ori %85, %90 : vector<16x128xi1>
    %92 = arith.extui %91 : vector<16x128xi1> to vector<16x128xi32>
    %93 = arith.sitofp %92 : vector<16x128xi32> to vector<16x128xf32>
    %94 = arith.addf %79, %93 : vector<16x128xf32>
    %95 = vector.broadcast %83 : vector<1x128xf32> to vector<16x128xf32>
    %96 = arith.mulf %93, %95 : vector<16x128xf32>
    %97 = arith.addf %82, %96 : vector<16x128xf32>
    %98 = vector.extract_strided_slice %4 {offsets = [6, 0], sizes = [1, 128], strides = [1, 1]} : vector<16x128xf32> to vector<1x128xf32>
    %99 = vector.broadcast %98 : vector<1x128xf32> to vector<16x128xf32>
    %100 = arith.cmpf ogt, %99, %4 : vector<16x128xf32>
    %101 = vector.broadcast %98 : vector<1x128xf32> to vector<16x128xf32>
    %102 = arith.cmpf oeq, %101, %4 : vector<16x128xf32>
    %c6_i32 = arith.constant 6 : i32
    %103 = vector.broadcast %c6_i32 : i32 to vector<16x128xi32>
    %104 = arith.cmpi sgt, %5, %103 : vector<16x128xi32>
    %105 = arith.andi %102, %104 : vector<16x128xi1>
    %106 = arith.ori %100, %105 : vector<16x128xi1>
    %107 = arith.extui %106 : vector<16x128xi1> to vector<16x128xi32>
    %108 = arith.sitofp %107 : vector<16x128xi32> to vector<16x128xf32>
    %109 = arith.addf %94, %108 : vector<16x128xf32>
    %110 = vector.broadcast %98 : vector<1x128xf32> to vector<16x128xf32>
    %111 = arith.mulf %108, %110 : vector<16x128xf32>
    %112 = arith.addf %97, %111 : vector<16x128xf32>
    %113 = vector.extract_strided_slice %4 {offsets = [7, 0], sizes = [1, 128], strides = [1, 1]} : vector<16x128xf32> to vector<1x128xf32>
    %114 = vector.broadcast %113 : vector<1x128xf32> to vector<16x128xf32>
    %115 = arith.cmpf ogt, %114, %4 : vector<16x128xf32>
    %116 = vector.broadcast %113 : vector<1x128xf32> to vector<16x128xf32>
    %117 = arith.cmpf oeq, %116, %4 : vector<16x128xf32>
    %c7_i32 = arith.constant 7 : i32
    %118 = vector.broadcast %c7_i32 : i32 to vector<16x128xi32>
    %119 = arith.cmpi sgt, %5, %118 : vector<16x128xi32>
    %120 = arith.andi %117, %119 : vector<16x128xi1>
    %121 = arith.ori %115, %120 : vector<16x128xi1>
    %122 = arith.extui %121 : vector<16x128xi1> to vector<16x128xi32>
    %123 = arith.sitofp %122 : vector<16x128xi32> to vector<16x128xf32>
    %124 = arith.addf %109, %123 : vector<16x128xf32>
    %125 = vector.broadcast %113 : vector<1x128xf32> to vector<16x128xf32>
    %126 = arith.mulf %123, %125 : vector<16x128xf32>
    %127 = arith.addf %112, %126 : vector<16x128xf32>
    %128 = vector.extract_strided_slice %4 {offsets = [8, 0], sizes = [1, 128], strides = [1, 1]} : vector<16x128xf32> to vector<1x128xf32>
    %129 = vector.broadcast %128 : vector<1x128xf32> to vector<16x128xf32>
    %130 = arith.cmpf ogt, %129, %4 : vector<16x128xf32>
    %131 = vector.broadcast %128 : vector<1x128xf32> to vector<16x128xf32>
    %132 = arith.cmpf oeq, %131, %4 : vector<16x128xf32>
    %c8_i32 = arith.constant 8 : i32
    %133 = vector.broadcast %c8_i32 : i32 to vector<16x128xi32>
    %134 = arith.cmpi sgt, %5, %133 : vector<16x128xi32>
    %135 = arith.andi %132, %134 : vector<16x128xi1>
    %136 = arith.ori %130, %135 : vector<16x128xi1>
    %137 = arith.extui %136 : vector<16x128xi1> to vector<16x128xi32>
    %138 = arith.sitofp %137 : vector<16x128xi32> to vector<16x128xf32>
    %139 = arith.addf %124, %138 : vector<16x128xf32>
    %140 = vector.broadcast %128 : vector<1x128xf32> to vector<16x128xf32>
    %141 = arith.mulf %138, %140 : vector<16x128xf32>
    %142 = arith.addf %127, %141 : vector<16x128xf32>
    %143 = vector.extract_strided_slice %4 {offsets = [9, 0], sizes = [1, 128], strides = [1, 1]} : vector<16x128xf32> to vector<1x128xf32>
    %144 = vector.broadcast %143 : vector<1x128xf32> to vector<16x128xf32>
    %145 = arith.cmpf ogt, %144, %4 : vector<16x128xf32>
    %146 = vector.broadcast %143 : vector<1x128xf32> to vector<16x128xf32>
    %147 = arith.cmpf oeq, %146, %4 : vector<16x128xf32>
    %c9_i32 = arith.constant 9 : i32
    %148 = vector.broadcast %c9_i32 : i32 to vector<16x128xi32>
    %149 = arith.cmpi sgt, %5, %148 : vector<16x128xi32>
    %150 = arith.andi %147, %149 : vector<16x128xi1>
    %151 = arith.ori %145, %150 : vector<16x128xi1>
    %152 = arith.extui %151 : vector<16x128xi1> to vector<16x128xi32>
    %153 = arith.sitofp %152 : vector<16x128xi32> to vector<16x128xf32>
    %154 = arith.addf %139, %153 : vector<16x128xf32>
    %155 = vector.broadcast %143 : vector<1x128xf32> to vector<16x128xf32>
    %156 = arith.mulf %153, %155 : vector<16x128xf32>
    %157 = arith.addf %142, %156 : vector<16x128xf32>
    %158 = vector.extract_strided_slice %4 {offsets = [10, 0], sizes = [1, 128], strides = [1, 1]} : vector<16x128xf32> to vector<1x128xf32>
    %159 = vector.broadcast %158 : vector<1x128xf32> to vector<16x128xf32>
    %160 = arith.cmpf ogt, %159, %4 : vector<16x128xf32>
    %161 = vector.broadcast %158 : vector<1x128xf32> to vector<16x128xf32>
    %162 = arith.cmpf oeq, %161, %4 : vector<16x128xf32>
    %c10_i32 = arith.constant 10 : i32
    %163 = vector.broadcast %c10_i32 : i32 to vector<16x128xi32>
    %164 = arith.cmpi sgt, %5, %163 : vector<16x128xi32>
    %165 = arith.andi %162, %164 : vector<16x128xi1>
    %166 = arith.ori %160, %165 : vector<16x128xi1>
    %167 = arith.extui %166 : vector<16x128xi1> to vector<16x128xi32>
    %168 = arith.sitofp %167 : vector<16x128xi32> to vector<16x128xf32>
    %169 = arith.addf %154, %168 : vector<16x128xf32>
    %170 = vector.broadcast %158 : vector<1x128xf32> to vector<16x128xf32>
    %171 = arith.mulf %168, %170 : vector<16x128xf32>
    %172 = arith.addf %157, %171 : vector<16x128xf32>
    %173 = vector.extract_strided_slice %4 {offsets = [11, 0], sizes = [1, 128], strides = [1, 1]} : vector<16x128xf32> to vector<1x128xf32>
    %174 = vector.broadcast %173 : vector<1x128xf32> to vector<16x128xf32>
    %175 = arith.cmpf ogt, %174, %4 : vector<16x128xf32>
    %176 = vector.broadcast %173 : vector<1x128xf32> to vector<16x128xf32>
    %177 = arith.cmpf oeq, %176, %4 : vector<16x128xf32>
    %c11_i32 = arith.constant 11 : i32
    %178 = vector.broadcast %c11_i32 : i32 to vector<16x128xi32>
    %179 = arith.cmpi sgt, %5, %178 : vector<16x128xi32>
    %180 = arith.andi %177, %179 : vector<16x128xi1>
    %181 = arith.ori %175, %180 : vector<16x128xi1>
    %182 = arith.extui %181 : vector<16x128xi1> to vector<16x128xi32>
    %183 = arith.sitofp %182 : vector<16x128xi32> to vector<16x128xf32>
    %184 = arith.addf %169, %183 : vector<16x128xf32>
    %185 = vector.broadcast %173 : vector<1x128xf32> to vector<16x128xf32>
    %186 = arith.mulf %183, %185 : vector<16x128xf32>
    %187 = arith.addf %172, %186 : vector<16x128xf32>
    %188 = vector.extract_strided_slice %4 {offsets = [12, 0], sizes = [1, 128], strides = [1, 1]} : vector<16x128xf32> to vector<1x128xf32>
    %189 = vector.broadcast %188 : vector<1x128xf32> to vector<16x128xf32>
    %190 = arith.cmpf ogt, %189, %4 : vector<16x128xf32>
    %191 = vector.broadcast %188 : vector<1x128xf32> to vector<16x128xf32>
    %192 = arith.cmpf oeq, %191, %4 : vector<16x128xf32>
    %c12_i32 = arith.constant 12 : i32
    %193 = vector.broadcast %c12_i32 : i32 to vector<16x128xi32>
    %194 = arith.cmpi sgt, %5, %193 : vector<16x128xi32>
    %195 = arith.andi %192, %194 : vector<16x128xi1>
    %196 = arith.ori %190, %195 : vector<16x128xi1>
    %197 = arith.extui %196 : vector<16x128xi1> to vector<16x128xi32>
    %198 = arith.sitofp %197 : vector<16x128xi32> to vector<16x128xf32>
    %199 = arith.addf %184, %198 : vector<16x128xf32>
    %200 = vector.broadcast %188 : vector<1x128xf32> to vector<16x128xf32>
    %201 = arith.mulf %198, %200 : vector<16x128xf32>
    %202 = arith.addf %187, %201 : vector<16x128xf32>
    %203 = vector.extract_strided_slice %4 {offsets = [13, 0], sizes = [1, 128], strides = [1, 1]} : vector<16x128xf32> to vector<1x128xf32>
    %204 = vector.broadcast %203 : vector<1x128xf32> to vector<16x128xf32>
    %205 = arith.cmpf ogt, %204, %4 : vector<16x128xf32>
    %206 = vector.broadcast %203 : vector<1x128xf32> to vector<16x128xf32>
    %207 = arith.cmpf oeq, %206, %4 : vector<16x128xf32>
    %c13_i32 = arith.constant 13 : i32
    %208 = vector.broadcast %c13_i32 : i32 to vector<16x128xi32>
    %209 = arith.cmpi sgt, %5, %208 : vector<16x128xi32>
    %210 = arith.andi %207, %209 : vector<16x128xi1>
    %211 = arith.ori %205, %210 : vector<16x128xi1>
    %212 = arith.extui %211 : vector<16x128xi1> to vector<16x128xi32>
    %213 = arith.sitofp %212 : vector<16x128xi32> to vector<16x128xf32>
    %214 = arith.addf %199, %213 : vector<16x128xf32>
    %215 = vector.broadcast %203 : vector<1x128xf32> to vector<16x128xf32>
    %216 = arith.mulf %213, %215 : vector<16x128xf32>
    %217 = arith.addf %202, %216 : vector<16x128xf32>
    %218 = vector.extract_strided_slice %4 {offsets = [14, 0], sizes = [1, 128], strides = [1, 1]} : vector<16x128xf32> to vector<1x128xf32>
    %219 = vector.broadcast %218 : vector<1x128xf32> to vector<16x128xf32>
    %220 = arith.cmpf ogt, %219, %4 : vector<16x128xf32>
    %221 = vector.broadcast %218 : vector<1x128xf32> to vector<16x128xf32>
    %222 = arith.cmpf oeq, %221, %4 : vector<16x128xf32>
    %c14_i32 = arith.constant 14 : i32
    %223 = vector.broadcast %c14_i32 : i32 to vector<16x128xi32>
    %224 = arith.cmpi sgt, %5, %223 : vector<16x128xi32>
    %225 = arith.andi %222, %224 : vector<16x128xi1>
    %226 = arith.ori %220, %225 : vector<16x128xi1>
    %227 = arith.extui %226 : vector<16x128xi1> to vector<16x128xi32>
    %228 = arith.sitofp %227 : vector<16x128xi32> to vector<16x128xf32>
    %229 = arith.addf %214, %228 : vector<16x128xf32>
    %230 = vector.broadcast %218 : vector<1x128xf32> to vector<16x128xf32>
    %231 = arith.mulf %228, %230 : vector<16x128xf32>
    %232 = arith.addf %217, %231 : vector<16x128xf32>
    %233 = vector.extract_strided_slice %4 {offsets = [15, 0], sizes = [1, 128], strides = [1, 1]} : vector<16x128xf32> to vector<1x128xf32>
    %234 = vector.broadcast %233 : vector<1x128xf32> to vector<16x128xf32>
    %235 = arith.cmpf ogt, %234, %4 : vector<16x128xf32>
    %236 = vector.broadcast %233 : vector<1x128xf32> to vector<16x128xf32>
    %237 = arith.cmpf oeq, %236, %4 : vector<16x128xf32>
    %c15_i32 = arith.constant 15 : i32
    %238 = vector.broadcast %c15_i32 : i32 to vector<16x128xi32>
    %239 = arith.cmpi sgt, %5, %238 : vector<16x128xi32>
    %240 = arith.andi %237, %239 : vector<16x128xi1>
    %241 = arith.ori %235, %240 : vector<16x128xi1>
    %242 = arith.extui %241 : vector<16x128xi1> to vector<16x128xi32>
    %243 = arith.sitofp %242 : vector<16x128xi32> to vector<16x128xf32>
    %244 = arith.addf %229, %243 : vector<16x128xf32>
    %245 = vector.broadcast %233 : vector<1x128xf32> to vector<16x128xf32>
    %246 = arith.mulf %243, %245 : vector<16x128xf32>
    %247 = arith.addf %232, %246 : vector<16x128xf32>
    %cst_3 = arith.constant 1.000000e+00 : f32
    %248 = vector.broadcast %cst_3 : f32 to vector<16x128xf32>
    %249 = arith.addf %244, %248 : vector<16x128xf32>
    %250 = arith.addf %247, %4 : vector<16x128xf32>
    %251 = arith.mulf %249, %4 : vector<16x128xf32>
    %cst_4 = arith.constant 1.000000e+00 : f32
    %252 = vector.broadcast %cst_4 : f32 to vector<16x128xf32>
    %253 = arith.addf %252, %251 : vector<16x128xf32>
    %254 = arith.cmpf ogt, %253, %250 : vector<16x128xf32>
    %255 = arith.extui %254 : vector<16x128xi1> to vector<16x128xi32>
    %256 = arith.sitofp %255 : vector<16x128xi32> to vector<16x128xf32>
    %257 = arith.mulf %256, %249 : vector<16x128xf32>
    %cst_5 = arith.constant dense<0xFF800000> : vector<128xf32>
    %258 = vector.multi_reduction <maximumf>, %257, %cst_5 [0] : vector<16x128xf32> to vector<128xf32>
    %259 = vector.shape_cast %258 : vector<128xf32> to vector<1x128xf32>
    %260 = arith.mulf %256, %4 : vector<16x128xf32>
    %cst_6 = arith.constant dense<0.000000e+00> : vector<128xf32>
    %261 = vector.multi_reduction <add>, %260, %cst_6 [0] : vector<16x128xf32> to vector<128xf32>
    %262 = vector.shape_cast %261 : vector<128xf32> to vector<1x128xf32>
    %cst_7 = arith.constant 1.000000e+00 : f32
    %263 = vector.broadcast %cst_7 : f32 to vector<1x128xf32>
    %264 = arith.subf %262, %263 : vector<1x128xf32>
    %265 = arith.divf %264, %259 : vector<1x128xf32>
    %266 = vector.broadcast %265 : vector<1x128xf32> to vector<16x128xf32>
    %267 = arith.subf %4, %266 : vector<16x128xf32>
    %cst_8 = arith.constant 0.000000e+00 : f32
    %268 = vector.broadcast %cst_8 : f32 to vector<16x128xf32>
    %269 = arith.maximumf %268, %267 : vector<16x128xf32>
    %c0_9 = arith.constant 0 : index
    %c0_10 = arith.constant 0 : index
    %270 = vector.load %arg2[%c0_9, %c0_10] : memref<16x128xf32, #tpu.memory_space<vmem>>, vector<16x128xf32>
    tpu.vector_store %arg2[%c0_9, %c0_10], %269 {strides = array<i32>} : memref<16x128xf32, #tpu.memory_space<vmem>>, vector<16x128xf32>,
    return
  }
  func.func @transform_0(%arg0: i32) -> (i32, i32) {
    %c0_i32 = arith.constant 0 : i32
    %c0_i32_0 = arith.constant 0 : i32
    return %c0_i32, %arg0 : i32, i32
  }
  func.func @transform_1(%arg0: i32) -> (i32, i32) {
    %c0_i32 = arith.constant 0 : i32
    %c0_i32_0 = arith.constant 0 : i32
    return %c0_i32, %arg0 : i32, i32
  }
}

</mosaic_0001>

<llo_original>
// kernel: tpu_custom_call.1
$region0: #{tpu_custom_call.1}
  #allocation0 [shape = 'u32[]', space=smem, size = 0x4, offset = 0x4, fixed_abs, tag = 'smem constant byte address 0x4 - core index']
  #allocation1 [shape = 'u32[144,128]{1,0:T(1,128)}', space=vmem, size = 0x12000, scoped, tag = 'internal scratch']
  %s0 = inlined_call_operand.hbm [shape: f32[16,128], index: 0, kind: input, shape index: {}]
  %s1 = inlined_call_operand.hbm [shape: f32[16,128], index: 1, kind: output, shape index: {}]
  %s2 = sld [smem:[#allocation0]]
  $region18: #{tpu_custom_call.1} parent=0
    _
  %s4 = ssub.s32 1, %s2
  %s5 = scalar_select 0, %s4, %s2
  $region1: #{tpu_custom_call.1} parent=0
    #allocation2 [shape = 'u8[8192]{0}', space=vmem, size = 0x2000, scoped, tag = 'input window, operand 0, single buffered']
    #allocation3 [shape = 's32[1]{0}', space=sflag, size = 0x4, scoped, tag = 'scoped memory for tpu_custom_call.1']
    #allocation4 [shape = 's32[1]{0}', space=sflag, size = 0x4, scoped, tag = 'scoped memory for tpu_custom_call.1']
    #allocation5 [shape = 'u8[8192]{0}', space=vmem, size = 0x2000, scoped, tag = 'output window, operand 0, single buffered']
    %6 = vsyncpa [#allocation3], 0
    %7 = vsyncpa [#allocation4], 0
    // Predicated region
    $region2: #{tpu_custom_call.1} parent=1 // pred_check
      _
    $region3: #{tpu_custom_call.1} parent=1 // pred_check_branch
      %9 = sbr.rel (0) target = $region5
    $region4: #{tpu_custom_call.1} parent=1 // pred_region
      %s11 = ssub.s32 256, 256
      %12 = vsyncadd [#allocation3], %s11
      %s13 = sshll.u32 [#allocation2], 4
      %s14 = int_to_ptr.vmem [resolvable:$true] %s13
      %19 = dma.hbm_to_vmem [thread:$0]  %s0, 256, %s14, [#allocation3], 128, 128, 8
    $region5: #{tpu_custom_call.1} parent=1 // pred_fallthru
      _
    // Predicated region
    $region6: #{tpu_custom_call.1} parent=1 // pred_check
      _
    $region7: #{tpu_custom_call.1} parent=1 // pred_check_branch
      %21 = sbr.rel (0) target = $region9
    $region8: #{tpu_custom_call.1} parent=1 // pred_region
      %22 = dma.done [#allocation3], 256
    $region9: #{tpu_custom_call.1} parent=1 // pred_fallthru
      _
    %v23 = vld [vmem:[#allocation2] sm:$0xff]
    %v24 = vld [vmem:[#allocation2 + $0x8] sm:$0xff]
    %v25 = vmax.f32 %v23, %v24
    %v26 = vrot.slane %v25, 4
    %v27 = vmax.f32 %v25, %v26
    %v28 = vrot.slane %v27, 2
    %v29 = vmax.f32 %v27, %v28
    %v30 = vrot.slane %v29, 1
    %v31 = vmax.f32 %v29, %v30
    %v32 = vsub.f32 %v23, %v31
    %v33 = vsub.f32 %v24, %v31
    %v34 = vlaneseq
    %v35 = vshrl.u32 %v34, 7
    %v36 = vadd.s32 %v35, 8
    %v37 = vlaneseq
    %v38 = vshrl.u32 %v37, 7
    %v39 = vsub.s32 0, %v38
    %v40 = vrot.slane %v32, %v39
    %vm41 = vcmp.gt.f32.partialorder %v40, %v32
    %vm42 = vcmp.gt.f32.partialorder %v40, %v33
    %vm43 = vcmp.eq.f32.partialorder %v40, %v32
    %vm44 = vcmp.eq.f32.partialorder %v40, %v33
    %vm45 = vcmp.gt.s32.totalorder %v35, 0
    %vm46 = vcmp.gt.s32.totalorder %v36, 0
    %vm47 = vmand %vm43, %vm45
    %vm48 = vmand %vm44, %vm46
    %vm49 = vmor %vm41, %vm47
    %vm50 = vmor %vm42, %vm48
    %v51 = vsel %vm49, 1, 0
    %v52 = vsel %vm50, 1, 0
    %v53 = vcvt.s32.f32 %v51
    %v54 = vcvt.s32.f32 %v52
    %v55 = vadd.f32 %v53, 0.0
    %v56 = vadd.f32 %v54, 0.0
    %v57 = vmul.f32 %v53, %v40
    %v58 = vmul.f32 %v54, %v40
    %v59 = vadd.f32 %v57, 0.0
    %v60 = vadd.f32 %v58, 0.0
    %v61 = vlaneseq
    %v62 = vshrl.u32 %v61, 7
    %v63 = vsub.s32 1, %v62
    %v64 = vrot.slane %v32, %v63
    %vm65 = vcmp.gt.f32.partialorder %v64, %v32
    %vm66 = vcmp.gt.f32.partialorder %v64, %v33
    %vm67 = vcmp.eq.f32.partialorder %v64, %v32
    %vm68 = vcmp.eq.f32.partialorder %v64, %v33
    %vm69 = vcmp.gt.s32.totalorder %v35, 1
    %vm70 = vcmp.gt.s32.totalorder %v36, 1
    %vm71 = vmand %vm67, %vm69
    %vm72 = vmand %vm68, %vm70
    %vm73 = vmor %vm65, %vm71
    %vm74 = vmor %vm66, %vm72
    %v75 = vsel %vm73, 1, 0
    %v76 = vsel %vm74, 1, 0
    %v77 = vcvt.s32.f32 %v75
    %v78 = vcvt.s32.f32 %v76
    %v79 = vadd.f32 %v55, %v77
    %v80 = vadd.f32 %v56, %v78
    %v81 = vmul.f32 %v77, %v64
    %v82 = vmul.f32 %v78, %v64
    %v83 = vadd.f32 %v59, %v81
    %v84 = vadd.f32 %v60, %v82
    %v85 = vlaneseq
    %v86 = vshrl.u32 %v85, 7
    %v87 = vsub.s32 2, %v86
    %v88 = vrot.slane %v32, %v87
    %vm89 = vcmp.gt.f32.partialorder %v88, %v32
    %vm90 = vcmp.gt.f32.partialorder %v88, %v33
    %vm91 = vcmp.eq.f32.partialorder %v88, %v32
    %vm92 = vcmp.eq.f32.partialorder %v88, %v33
    %vm93 = vcmp.gt.s32.totalorder %v35, 2
    %vm94 = vcmp.gt.s32.totalorder %v36, 2
    %vm95 = vmand %vm91, %vm93
    %vm96 = vmand %vm92, %vm94
    %vm97 = vmor %vm89, %vm95
    %vm98 = vmor %vm90, %vm96
    %v99 = vsel %vm97, 1, 0
    %v100 = vsel %vm98, 1, 0
    %v101 = vcvt.s32.f32 %v99
    %v102 = vcvt.s32.f32 %v100
    %v103 = vadd.f32 %v79, %v101
    %v104 = vadd.f32 %v80, %v102
    %v105 = vmul.f32 %v101, %v88
    %v106 = vmul.f32 %v102, %v88
    %v107 = vadd.f32 %v83, %v105
    %v108 = vadd.f32 %v84, %v106
    %v109 = vlaneseq
    %v110 = vshrl.u32 %v109, 7
    %v111 = vsub.s32 3, %v110
    %v112 = vrot.slane %v32, %v111
    %vm113 = vcmp.gt.f32.partialorder %v112, %v32
    %vm114 = vcmp.gt.f32.partialorder %v112, %v33
    %vm115 = vcmp.eq.f32.partialorder %v112, %v32
    %vm116 = vcmp.eq.f32.partialorder %v112, %v33
    %vm117 = vcmp.gt.s32.totalorder %v35, 3
    %vm118 = vcmp.gt.s32.totalorder %v36, 3
    %vm119 = vmand %vm115, %vm117
    %vm120 = vmand %vm116, %vm118
    %vm121 = vmor %vm113, %vm119
    %vm122 = vmor %vm114, %vm120
    %v123 = vsel %vm121, 1, 0
    %v124 = vsel %vm122, 1, 0
    %v125 = vcvt.s32.f32 %v123
    %v126 = vcvt.s32.f32 %v124
    %v127 = vadd.f32 %v103, %v125
    %v128 = vadd.f32 %v104, %v126
    %v129 = vmul.f32 %v125, %v112
    %v130 = vmul.f32 %v126, %v112
    %v131 = vadd.f32 %v107, %v129
    %v132 = vadd.f32 %v108, %v130
    %v133 = vlaneseq
    %v134 = vshrl.u32 %v133, 7
    %v135 = vsub.s32 4, %v134
    %v136 = vrot.slane %v32, %v135
    %vm137 = vcmp.gt.f32.partialorder %v136, %v32
    %vm138 = vcmp.gt.f32.partialorder %v136, %v33
    %vm139 = vcmp.eq.f32.partialorder %v136, %v32
    %vm140 = vcmp.eq.f32.partialorder %v136, %v33
    %vm141 = vcmp.gt.s32.totalorder %v35, 4
    %vm142 = vcmp.gt.s32.totalorder %v36, 4
    %vm143 = vmand %vm139, %vm141
    %vm144 = vmand %vm140, %vm142
    %vm145 = vmor %vm137, %vm143
    %vm146 = vmor %vm138, %vm144
    %v147 = vsel %vm145, 1, 0
    %v148 = vsel %vm146, 1, 0
    %v149 = vcvt.s32.f32 %v147
    %v150 = vcvt.s32.f32 %v148
    %v151 = vadd.f32 %v127, %v149
    %v152 = vadd.f32 %v128, %v150
    %v153 = vmul.f32 %v149, %v136
    %v154 = vmul.f32 %v150, %v136
    %v155 = vadd.f32 %v131, %v153
    %v156 = vadd.f32 %v132, %v154
    %v157 = vlaneseq
    %v158 = vshrl.u32 %v157, 7
    %v159 = vsub.s32 5, %v158
    %v160 = vrot.slane %v32, %v159
    %vm161 = vcmp.gt.f32.partialorder %v160, %v32
    %vm162 = vcmp.gt.f32.partialorder %v160, %v33
    %vm163 = vcmp.eq.f32.partialorder %v160, %v32
    %vm164 = vcmp.eq.f32.partialorder %v160, %v33
    %vm165 = vcmp.gt.s32.totalorder %v35, 5
    %vm166 = vcmp.gt.s32.totalorder %v36, 5
    %vm167 = vmand %vm163, %vm165
    %vm168 = vmand %vm164, %vm166
    %vm169 = vmor %vm161, %vm167
    %vm170 = vmor %vm162, %vm168
    %v171 = vsel %vm169, 1, 0
    %v172 = vsel %vm170, 1, 0
    %v173 = vcvt.s32.f32 %v171
    %v174 = vcvt.s32.f32 %v172
    %v175 = vadd.f32 %v151, %v173
    %v176 = vadd.f32 %v152, %v174
    %v177 = vmul.f32 %v173, %v160
    %v178 = vmul.f32 %v174, %v160
    %v179 = vadd.f32 %v155, %v177
    %v180 = vadd.f32 %v156, %v178
    %v181 = vlaneseq
    %v182 = vshrl.u32 %v181, 7
    %v183 = vsub.s32 6, %v182
    %v184 = vrot.slane %v32, %v183
    %vm185 = vcmp.gt.f32.partialorder %v184, %v32
    %vm186 = vcmp.gt.f32.partialorder %v184, %v33
    %vm187 = vcmp.eq.f32.partialorder %v184, %v32
    %vm188 = vcmp.eq.f32.partialorder %v184, %v33
    %vm189 = vcmp.gt.s32.totalorder %v35, 6
    %vm190 = vcmp.gt.s32.totalorder %v36, 6
    %vm191 = vmand %vm187, %vm189
    %vm192 = vmand %vm188, %vm190
    %vm193 = vmor %vm185, %vm191
    %vm194 = vmor %vm186, %vm192
    %v195 = vsel %vm193, 1, 0
    %v196 = vsel %vm194, 1, 0
    %v197 = vcvt.s32.f32 %v195
    %v198 = vcvt.s32.f32 %v196
    %v199 = vadd.f32 %v175, %v197
    %v200 = vadd.f32 %v176, %v198
    %v201 = vmul.f32 %v197, %v184
    %v202 = vmul.f32 %v198, %v184
    %v203 = vadd.f32 %v179, %v201
    %v204 = vadd.f32 %v180, %v202
    %v205 = vlaneseq
    %v206 = vshrl.u32 %v205, 7
    %v207 = vsub.s32 7, %v206
    %v208 = vrot.slane %v32, %v207
    %vm209 = vcmp.gt.f32.partialorder %v208, %v32
    %vm210 = vcmp.gt.f32.partialorder %v208, %v33
    %vm211 = vcmp.eq.f32.partialorder %v208, %v32
    %vm212 = vcmp.eq.f32.partialorder %v208, %v33
    %vm213 = vcmp.gt.s32.totalorder %v35, 7
    %vm214 = vcmp.gt.s32.totalorder %v36, 7
    %vm215 = vmand %vm211, %vm213
    %vm216 = vmand %vm212, %vm214
    %vm217 = vmor %vm209, %vm215
    %vm218 = vmor %vm210, %vm216
    %v219 = vsel %vm217, 1, 0
    %v220 = vsel %vm218, 1, 0
    %v221 = vcvt.s32.f32 %v219
    %v222 = vcvt.s32.f32 %v220
    %v223 = vadd.f32 %v199, %v221
    %v224 = vadd.f32 %v200, %v222
    %v225 = vmul.f32 %v221, %v208
    %v226 = vmul.f32 %v222, %v208
    %v227 = vadd.f32 %v203, %v225
    %v228 = vadd.f32 %v204, %v226
    %v229 = vlaneseq
    %v230 = vshrl.u32 %v229, 7
    %v231 = vsub.s32 0, %v230
    %v232 = vrot.slane %v33, %v231
    %vm233 = vcmp.gt.f32.partialorder %v232, %v32
    %vm234 = vcmp.gt.f32.partialorder %v232, %v33
    %vm235 = vcmp.eq.f32.partialorder %v232, %v32
    %vm236 = vcmp.eq.f32.partialorder %v232, %v33
    %vm237 = vcmp.gt.s32.totalorder %v35, 8
    %vm238 = vcmp.gt.s32.totalorder %v36, 8
    %vm239 = vmand %vm235, %vm237
    %vm240 = vmand %vm236, %vm238
    %vm241 = vmor %vm233, %vm239
    %vm242 = vmor %vm234, %vm240
    %v243 = vsel %vm241, 1, 0
    %v244 = vsel %vm242, 1, 0
    %v245 = vcvt.s32.f32 %v243
    %v246 = vcvt.s32.f32 %v244
    %v247 = vadd.f32 %v223, %v245
    %v248 = vadd.f32 %v224, %v246
    %v249 = vmul.f32 %v245, %v232
    %v250 = vmul.f32 %v246, %v232
    %v251 = vadd.f32 %v227, %v249
    %v252 = vadd.f32 %v228, %v250
    %v253 = vlaneseq
    %v254 = vshrl.u32 %v253, 7
    %v255 = vsub.s32 1, %v254
    %v256 = vrot.slane %v33, %v255
    %vm257 = vcmp.gt.f32.partialorder %v256, %v32
    %vm258 = vcmp.gt.f32.partialorder %v256, %v33
    %vm259 = vcmp.eq.f32.partialorder %v256, %v32
    %vm260 = vcmp.eq.f32.partialorder %v256, %v33
    %vm261 = vcmp.gt.s32.totalorder %v35, 9
    %vm262 = vcmp.gt.s32.totalorder %v36, 9
    %vm263 = vmand %vm259, %vm261
    %vm264 = vmand %vm260, %vm262
    %vm265 = vmor %vm257, %vm263
    %vm266 = vmor %vm258, %vm264
    %v267 = vsel %vm265, 1, 0
    %v268 = vsel %vm266, 1, 0
    %v269 = vcvt.s32.f32 %v267
    %v270 = vcvt.s32.f32 %v268
    %v271 = vadd.f32 %v247, %v269
    %v272 = vadd.f32 %v248, %v270
    %v273 = vmul.f32 %v269, %v256
    %v274 = vmul.f32 %v270, %v256
    %v275 = vadd.f32 %v251, %v273
    %v276 = vadd.f32 %v252, %v274
    %v277 = vlaneseq
    %v278 = vshrl.u32 %v277, 7
    %v279 = vsub.s32 2, %v278
    %v280 = vrot.slane %v33, %v279
    %vm281 = vcmp.gt.f32.partialorder %v280, %v32
    %vm282 = vcmp.gt.f32.partialorder %v280, %v33
    %vm283 = vcmp.eq.f32.partialorder %v280, %v32
    %vm284 = vcmp.eq.f32.partialorder %v280, %v33
    %vm285 = vcmp.gt.s32.totalorder %v35, 10
    %vm286 = vcmp.gt.s32.totalorder %v36, 10
    %vm287 = vmand %vm283, %vm285
    %vm288 = vmand %vm284, %vm286
    %vm289 = vmor %vm281, %vm287
    %vm290 = vmor %vm282, %vm288
    %v291 = vsel %vm289, 1, 0
    %v292 = vsel %vm290, 1, 0
    %v293 = vcvt.s32.f32 %v291
    %v294 = vcvt.s32.f32 %v292
    %v295 = vadd.f32 %v271, %v293
    %v296 = vadd.f32 %v272, %v294
    %v297 = vmul.f32 %v293, %v280
    %v298 = vmul.f32 %v294, %v280
    %v299 = vadd.f32 %v275, %v297
    %v300 = vadd.f32 %v276, %v298
    %v301 = vlaneseq
    %v302 = vshrl.u32 %v301, 7
    %v303 = vsub.s32 3, %v302
    %v304 = vrot.slane %v33, %v303
    %vm305 = vcmp.gt.f32.partialorder %v304, %v32
    %vm306 = vcmp.gt.f32.partialorder %v304, %v33
    %vm307 = vcmp.eq.f32.partialorder %v304, %v32
    %vm308 = vcmp.eq.f32.partialorder %v304, %v33
    %vm309 = vcmp.gt.s32.totalorder %v35, 11
    %vm310 = vcmp.gt.s32.totalorder %v36, 11
    %vm311 = vmand %vm307, %vm309
    %vm312 = vmand %vm308, %vm310
    %vm313 = vmor %vm305, %vm311
    %vm314 = vmor %vm306, %vm312
    %v315 = vsel %vm313, 1, 0
    %v316 = vsel %vm314, 1, 0
    %v317 = vcvt.s32.f32 %v315
    %v318 = vcvt.s32.f32 %v316
    %v319 = vadd.f32 %v295, %v317
    %v320 = vadd.f32 %v296, %v318
    %v321 = vmul.f32 %v317, %v304
    %v322 = vmul.f32 %v318, %v304
    %v323 = vadd.f32 %v299, %v321
    %v324 = vadd.f32 %v300, %v322
    %v325 = vlaneseq
    %v326 = vshrl.u32 %v325, 7
    %v327 = vsub.s32 4, %v326
    %v328 = vrot.slane %v33, %v327
    %vm329 = vcmp.gt.f32.partialorder %v328, %v32
    %vm330 = vcmp.gt.f32.partialorder %v328, %v33
    %vm331 = vcmp.eq.f32.partialorder %v328, %v32
    %vm332 = vcmp.eq.f32.partialorder %v328, %v33
    %vm333 = vcmp.gt.s32.totalorder %v35, 12
    %vm334 = vcmp.gt.s32.totalorder %v36, 12
    %vm335 = vmand %vm331, %vm333
    %vm336 = vmand %vm332, %vm334
    %vm337 = vmor %vm329, %vm335
    %vm338 = vmor %vm330, %vm336
    %v339 = vsel %vm337, 1, 0
    %v340 = vsel %vm338, 1, 0
    %v341 = vcvt.s32.f32 %v339
    %v342 = vcvt.s32.f32 %v340
    %v343 = vadd.f32 %v319, %v341
    %v344 = vadd.f32 %v320, %v342
    %v345 = vmul.f32 %v341, %v328
    %v346 = vmul.f32 %v342, %v328
    %v347 = vadd.f32 %v323, %v345
    %v348 = vadd.f32 %v324, %v346
    %v349 = vlaneseq
    %v350 = vshrl.u32 %v349, 7
    %v351 = vsub.s32 5, %v350
    %v352 = vrot.slane %v33, %v351
    %vm353 = vcmp.gt.f32.partialorder %v352, %v32
    %vm354 = vcmp.gt.f32.partialorder %v352, %v33
    %vm355 = vcmp.eq.f32.partialorder %v352, %v32
    %vm356 = vcmp.eq.f32.partialorder %v352, %v33
    %vm357 = vcmp.gt.s32.totalorder %v35, 13
    %vm358 = vcmp.gt.s32.totalorder %v36, 13
    %vm359 = vmand %vm355, %vm357
    %vm360 = vmand %vm356, %vm358
    %vm361 = vmor %vm353, %vm359
    %vm362 = vmor %vm354, %vm360
    %v363 = vsel %vm361, 1, 0
    %v364 = vsel %vm362, 1, 0
    %v365 = vcvt.s32.f32 %v363
    %v366 = vcvt.s32.f32 %v364
    %v367 = vadd.f32 %v343, %v365
    %v368 = vadd.f32 %v344, %v366
    %v369 = vmul.f32 %v365, %v352
    %v370 = vmul.f32 %v366, %v352
    %v371 = vadd.f32 %v347, %v369
    %v372 = vadd.f32 %v348, %v370
    %v373 = vlaneseq
    %v374 = vshrl.u32 %v373, 7
    %v375 = vsub.s32 6, %v374
    %v376 = vrot.slane %v33, %v375
    %vm377 = vcmp.gt.f32.partialorder %v376, %v32
    %vm378 = vcmp.gt.f32.partialorder %v376, %v33
    %vm379 = vcmp.eq.f32.partialorder %v376, %v32
    %vm380 = vcmp.eq.f32.partialorder %v376, %v33
    %vm381 = vcmp.gt.s32.totalorder %v35, 14
    %vm382 = vcmp.gt.s32.totalorder %v36, 14
    %vm383 = vmand %vm379, %vm381
    %vm384 = vmand %vm380, %vm382
    %vm385 = vmor %vm377, %vm383
    %vm386 = vmor %vm378, %vm384
    %v387 = vsel %vm385, 1, 0
    %v388 = vsel %vm386, 1, 0
    %v389 = vcvt.s32.f32 %v387
    %v390 = vcvt.s32.f32 %v388
    %v391 = vadd.f32 %v367, %v389
    %v392 = vadd.f32 %v368, %v390
    %v393 = vmul.f32 %v389, %v376
    %v394 = vmul.f32 %v390, %v376
    %v395 = vadd.f32 %v371, %v393
    %v396 = vadd.f32 %v372, %v394
    %v397 = vlaneseq
    %v398 = vshrl.u32 %v397, 7
    %v399 = vsub.s32 7, %v398
    %v400 = vrot.slane %v33, %v399
    %vm401 = vcmp.gt.f32.partialorder %v400, %v32
    %vm402 = vcmp.gt.f32.partialorder %v400, %v33
    %vm403 = vcmp.eq.f32.partialorder %v400, %v32
    %vm404 = vcmp.eq.f32.partialorder %v400, %v33
    %vm405 = vcmp.gt.s32.totalorder %v35, 15
    %vm406 = vcmp.gt.s32.totalorder %v36, 15
    %vm407 = vmand %vm403, %vm405
    %vm408 = vmand %vm404, %vm406
    %vm409 = vmor %vm401, %vm407
    %vm410 = vmor %vm402, %vm408
    %v411 = vsel %vm409, 1, 0
    %v412 = vsel %vm410, 1, 0
    %v413 = vcvt.s32.f32 %v411
    %v414 = vcvt.s32.f32 %v412
    %v415 = vadd.f32 %v391, %v413
    %v416 = vadd.f32 %v392, %v414
    %v417 = vmul.f32 %v413, %v400
    %v418 = vmul.f32 %v414, %v400
    %v419 = vadd.f32 %v395, %v417
    %v420 = vadd.f32 %v396, %v418
    %v421 = vadd.f32 %v415, 1.0
    %v422 = vadd.f32 %v416, 1.0
    %v423 = vadd.f32 %v419, %v32
    %v424 = vadd.f32 %v420, %v33
    %v425 = vmul.f32 %v421, %v32
    %v426 = vmul.f32 %v422, %v33
    %v427 = vadd.f32 %v425, 1.0
    %v428 = vadd.f32 %v426, 1.0
    %vm429 = vcmp.gt.f32.partialorder %v427, %v423
    %vm430 = vcmp.gt.f32.partialorder %v428, %v424
    %v431 = vsel %vm429, 1, 0
    %v432 = vsel %vm430, 1, 0
    %v433 = vcvt.s32.f32 %v431
    %v434 = vcvt.s32.f32 %v432
    %v435 = vmul.f32 %v433, %v421
    %v436 = vmul.f32 %v434, %v422
    %v437 = vmax.f32 %v435, %v436
    %v438 = vrot.slane %v437, 4
    %v439 = vmax.f32 %v437, %v438
    %v440 = vrot.slane %v439, 2
    %v441 = vmax.f32 %v439, %v440
    %v442 = vrot.slane %v441, 1
    %v443 = vmax.f32 %v441, %v442
    %v444 = vmul.f32 %v433, %v32
    %v445 = vmul.f32 %v434, %v33
    %v446 = vadd.f32 %v444, %v445
    %v447 = vrot.slane %v446, 4
    %v448 = vadd.f32 %v446, %v447
    %v449 = vrot.slane %v448, 2
    %v450 = vadd.f32 %v448, %v449
    %v451 = vrot.slane %v450, 1
    %v452 = vadd.f32 %v450, %v451
    %v453 = vsub.f32 %v452, 1.0
    %v454 = vrcp.pop %v443
    %v455 = vmul.f32 %v453, %v454
    %v456 = vsub.f32 %v32, %v455
    %v457 = vsub.f32 %v33, %v455
    %v458 = vmax.f32 %v456, 0.0
    %v459 = vmax.f32 %v457, 0.0
    %460 = vst [vmem:[#allocation5] sm:$0xff] %v458
    %461 = vst [vmem:[#allocation5 + $0x8] sm:$0xff] %v459
    // Predicated region
    $region10: #{tpu_custom_call.1} parent=1 // pred_check
      _
    $region11: #{tpu_custom_call.1} parent=1 // pred_check_branch
      %463 = sbr.rel (0) target = $region13
    $region12: #{tpu_custom_call.1} parent=1 // pred_region
      %s465 = ssub.s32 256, 256
      %466 = vsyncadd [#allocation4], %s465
      %s467 = sshll.u32 [#allocation5], 4
      %s468 = int_to_ptr.vmem [resolvable:$true] %s467
      %473 = dma.vmem_to_hbm [thread:$0]  %s468, 256, %s1, [#allocation4], 128, 128, 8
    $region13: #{tpu_custom_call.1} parent=1 // pred_fallthru
      _
    // Predicated region
    $region14: #{tpu_custom_call.1} parent=1 // pred_check
      _
    $region15: #{tpu_custom_call.1} parent=1 // pred_check_branch
      %475 = sbr.rel (0) target = $region17
    $region16: #{tpu_custom_call.1} parent=1 // pred_region
      %476 = dma.done [#allocation4], 256
    $region17: #{tpu_custom_call.1} parent=1 // pred_fallthru
      _
    %477 = vsyncpa [#allocation3], 1
    %478 = vsyncpa [#allocation4], 1

</llo_original>
